<compile_context>
chip_gen: v7x
topology: tpu7x:2x2x1
jax: 0.10.0
libtpu: 0.0.40
codegen_flags: <defaults>
</compile_context>

<pallas_src>
import functools

import numpy as np
import jax
import jax.numpy as jnp
from jax.experimental import pallas as pl
from jax.experimental.pallas import tpu as pltpu

LANE = 128
SUBLANE = 8


def _round_up(x, m):
    return (x + m - 1) // m * m


# --------------------------------------------------------------------------- #
# Fused kernel: [Conv1d('same') + ReLU] x num_layers  +  masked max readout
# --------------------------------------------------------------------------- #
def _fused_cnn_kernel(lens_ref, x_ref, w_ref, b_ref, hid_ref, graph_ref, *,
                      num_layers, K, padding, TB, Lp, Lmax, shortcut_layers):
    # lens_ref : SMEM (Bp,) int32          valid residues per protein (prefetch)
    # x_ref    : VMEM (TB*Lp, Cpad) f32    padded activations, TB proteins/slab
    # w_ref    : VMEM (NL, K, Cpad, Cpad)  per-layer, per-tap weights (Cin x Cout)
    # b_ref    : VMEM (NL, 1, Cpad)        per-layer biases
    # hid_ref  : VMEM (TB*Lp, Cpad)        last hidden layer (padded layout)
    # graph_ref: VMEM (1, TB, Cpad)        masked max readout per protein
    R = TB * Lp
    Cpad = x_ref.shape[-1]

    # Rows >= Lmax inside each protein slab are the zero halo: zero in the input
    # and re-zeroed after every layer, so the rolls below pull in exact zeros at
    # both sequence ends (== Conv1d zero padding) without any jnp.pad.
    pos_in_prot = jax.lax.broadcasted_iota(jnp.int32, (TB, Lp, Cpad), 1)
    tail_mask = pos_in_prot < Lmax

    def zero_tail(h2d):
        h3 = jnp.where(tail_mask, h2d.reshape(TB, Lp, Cpad), 0.0)
        return h3.reshape(R, Cpad)

    x = x_ref[...].astype(jnp.float32)
    for layer in range(num_layers):
        acc = jnp.zeros((R, Cpad), jnp.float32)
        for k in range(K):
            # out[i] += x[i + k - padding] @ w[k]  (PyTorch cross-correlation)
            shift = (padding - k) % R
            xs = x if shift == 0 else pltpu.roll(x, shift=shift, axis=0)
            acc = acc + jnp.dot(xs, w_ref[layer, k],
                                preferred_element_type=jnp.float32)
        acc = acc + b_ref[layer]                     # (1, Cpad) broadcast
        h = jnp.maximum(acc, 0.0)                    # ReLU (module default)
        h = zero_tail(h)                             # keep halo rows exactly 0
        if layer in shortcut_layers:                 # short_cut and dims match
            h = h + x
        x = h

    hid_ref[...] = x.astype(hid_ref.dtype)

    # ---- masked max readout (MaxReadout over valid residues), fused epilogue --
    i = pl.program_id(0)
    pos = jax.lax.broadcasted_iota(jnp.int32, (Lp, Cpad), 0)
    for t in range(TB):                              # TB is small & static
        n = lens_ref[i * TB + t]
        seg = x[t * Lp:(t + 1) * Lp, :]              # sublane-aligned slice
        masked = jnp.where(pos < n, seg, -jnp.inf)
        mx = jnp.max(masked, axis=0, keepdims=True)  # (1, Cpad)
        # empty protein -> 0 instead of -inf (matches zero-init scatter_max)
        graph_ref[0, t:t + 1, :] = jnp.where(n > 0, mx, 0.0)


# --------------------------------------------------------------------------- #
# Forward pass wrapper
# --------------------------------------------------------------------------- #
def protein_cnn_forward(params, residue_feature, num_residues, *,
                        kernel_size=3, stride=1, padding=1, padding_id=None,
                        short_cut=False, concat_hidden=False):
    """ProteinConvolutionalNetwork.forward.

    params: list of (weight (Cout, Cin, K), bias (Cout,)) per Conv1d layer.
    residue_feature: (all_residues, input_dim) float (variadic over graphs).
    num_residues: residues per graph.
    """
    if concat_hidden:
        # TODO(synk): concat_hidden=True needs every layer's hidden kept around;
        # not implemented in the fused kernel (module default is False).
        raise NotImplementedError("concat_hidden=True is not supported")
    if stride != 1 or kernel_size % 2 != 1 or 2 * padding != kernel_size - 1:
        # TODO(synk): only the default 'same' convolution (stride=1, odd K,
        # padding=(K-1)//2) is implemented.
        raise NotImplementedError("only stride=1 'same' convolutions supported")

    lens = [int(n) for n in num_residues]
    B = len(lens)
    Lmax = max(lens)
    total = sum(lens)
    Cin = int(residue_feature.shape[1])
    dims = [Cin] + [int(w.shape[0]) for (w, _) in params]
    NL = len(params)
    K = kernel_size
    Cpad = _round_up(max(dims), LANE)
    out_dim = dims[-1]
    if padding_id is None:
        padding_id = Cin - 1

    # Per-protein slab length: >= Lmax + padding zero halo rows, sublane aligned.
    Lp = _round_up(Lmax + padding, SUBLANE)

    # Batch tile: target ~2K activation rows (~1 MiB f32 block) per grid step.
    TARGET_ROWS = 2048
    TB = max(1, min(B, TARGET_ROWS // max(Lp, 1), 64))
    Bp = _round_up(B, TB)
    num_tiles = Bp // TB
    R_blk = TB * Lp

    lens_np = np.asarray(lens, np.int32)
    off_np = np.concatenate([[0], np.cumsum(lens_np)]).astype(np.int32)

    # ---- variadic_to_padded(value=padding_id): one vectorized gather ---------
    l_idx = np.arange(Lmax, dtype=np.int32)[None, :]                   # (1, Lmax)
    src = off_np[:B, None] + np.minimum(l_idx, np.maximum(lens_np[:, None] - 1, 0))
    gathered = jnp.take(residue_feature.astype(jnp.float32),
                        jnp.asarray(src, jnp.int32), axis=0)           # (B,Lmax,Cin)
    valid = jnp.asarray(l_idx < lens_np[:, None])                      # (B, Lmax)
    padded = jnp.where(valid[..., None], gathered, jnp.float32(padding_id))

    # Lane-dense, halo-padded activation slab: (Bp*Lp, Cpad); halo rows are 0.
    x_full = jnp.zeros((Bp, Lp, Cpad), jnp.float32)
    x_full = x_full.at[:B, :Lmax, :Cin].set(padded)
    x_flat = x_full.reshape(Bp * Lp, Cpad)

    # ---- stack + zero-pad weights / biases to a uniform lane-dense layout ----
    w_stack = jnp.zeros((NL, K, Cpad, Cpad), jnp.float32)
    b_stack = jnp.zeros((NL, 1, Cpad), jnp.float32)
    for li, (w, b) in enumerate(params):
        cout, cin, kk = (int(s) for s in w.shape)
        assert kk == K and cin == dims[li] and cout == dims[li + 1]
        w_stack = w_stack.at[li, :, :cin, :cout].set(
            jnp.transpose(w, (2, 1, 0)).astype(jnp.float32))
        b_stack = b_stack.at[li, 0, :cout].set(b.astype(jnp.float32))

    lens_dev = jnp.zeros((Bp,), jnp.int32).at[:B].set(jnp.asarray(lens_np))

    shortcut_layers = frozenset(
        li for li in range(NL) if short_cut and dims[li + 1] == dims[li])

    kernel = functools.partial(
        _fused_cnn_kernel, num_layers=NL, K=K, padding=padding,
        TB=TB, Lp=Lp, Lmax=Lmax, shortcut_layers=shortcut_layers)

    hid_flat, graph_pad = pl.pallas_call(
        kernel,
        out_shape=(
            jax.ShapeDtypeStruct((Bp * Lp, Cpad), jnp.float32),
            jax.ShapeDtypeStruct((num_tiles, TB, Cpad), jnp.float32),
        ),
        grid_spec=pltpu.PrefetchScalarGridSpec(
            num_scalar_prefetch=1,
            grid=(num_tiles,),
            in_specs=[
                pl.BlockSpec((R_blk, Cpad), lambda i, lens: (i, 0)),
                pl.BlockSpec((NL, K, Cpad, Cpad), lambda i, lens: (0, 0, 0, 0)),
                pl.BlockSpec((NL, 1, Cpad), lambda i, lens: (0, 0, 0)),
            ],
            out_specs=[
                pl.BlockSpec((R_blk, Cpad), lambda i, lens: (i, 0)),
                pl.BlockSpec((1, TB, Cpad), lambda i, lens: (i, 0, 0)),
            ],
        ),
        compiler_params=pltpu.CompilerParams(
            dimension_semantics=("parallel",)),
    )(lens_dev, x_flat, w_stack, b_stack)

    # ---- padded_to_variadic + channel un-padding: one vectorized gather ------
    if total > 0:
        flat_idx = np.concatenate(
            [b * Lp + np.arange(n, dtype=np.int32) for b, n in enumerate(lens)])
    else:
        flat_idx = np.zeros((0,), np.int32)
    residue_out = jnp.take(hid_flat, jnp.asarray(flat_idx, jnp.int32),
                           axis=0)[:, :out_dim]
    graph_out = graph_pad.reshape(Bp, Cpad)[:B, :out_dim]

    return {"graph_feature": graph_out, "residue_feature": residue_out}


# --------------------------------------------------------------------------- #
# Pure-JAX reference (mirrors the torchdrug module) for in-script verification
# --------------------------------------------------------------------------- #
def _reference_forward(params, residue_feature, num_residues, *, padding,
                       padding_id, short_cut=False, concat_hidden=False):
    lens = [int(n) for n in num_residues]
    B, Lmax = len(lens), max(lens)
    Cin = residue_feature.shape[1]
    x = jnp.full((B, Lmax, Cin), float(padding_id), jnp.float32)
    off = 0
    for i, n in enumerate(lens):
        x = x.at[i, :n].set(residue_feature[off:off + n].astype(jnp.float32))
        off += n
    hiddens = []
    layer_input = x
    for (w, b) in params:
        K = w.shape[2]
        L = layer_input.shape[1]
        xp = jnp.pad(layer_input, ((0, 0), (padding, padding), (0, 0)))
        acc = jnp.zeros((B, L, w.shape[0]), jnp.float32) + b
        for k in range(K):
            acc = acc + jnp.einsum('bli,oi->blo', xp[:, k:k + L, :], w[:, :, k],
                                   precision=jax.lax.Precision.HIGHEST)
        h = jnp.maximum(acc, 0.0)
        if short_cut and h.shape == layer_input.shape:
            h = h + layer_input
        hiddens.append(h)
        layer_input = h
    hidden = jnp.concatenate(hiddens, -1) if concat_hidden else hiddens[-1]
    residue = jnp.concatenate([hidden[i, :n] for i, n in enumerate(lens)], axis=0)
    pos = jnp.arange(Lmax)[None, :, None]
    n_arr = jnp.asarray(lens)[:, None, None]
    graph = jnp.max(jnp.where(pos < n_arr, hidden, -jnp.inf), axis=1)
    return {"graph_feature": graph, "residue_feature": residue}


# --------------------------------------------------------------------------- #
if __name__ == "__main__":
    key = jax.random.PRNGKey(0)

    input_dim = 21            # 21 residue types (module docstring)
    hidden_dims = [32, 32]
    kernel_size, stride, padding = 3, 1, 1
    dims = [input_dim] + hidden_dims

    # Deterministic Conv1d parameter init (PyTorch-like uniform bounds).
    params = []
    for i in range(len(dims) - 1):
        key, kw, kb = jax.random.split(key, 3)
        fan_in = dims[i] * kernel_size
        bound = 1.0 / (fan_in ** 0.5)
        w = jax.random.uniform(kw, (dims[i + 1], dims[i], kernel_size),
                               jnp.float32, -bound, bound)
        b = jax.random.uniform(kb, (dims[i + 1],), jnp.float32, -bound, bound)
        params.append((w, b))

    # Two proteins with 16 and 12 residues -> variadic one-hot residue features.
    num_residues = [16, 12]
    total = sum(num_residues)
    key, kx = jax.random.split(key)
    tokens = jax.random.randint(kx, (total,), 0, input_dim)
    residue_feature = jax.nn.one_hot(tokens, input_dim, dtype=jnp.float32)

    out = protein_cnn_forward(params, residue_feature, num_residues,
                              kernel_size=kernel_size, stride=stride,
                              padding=padding, padding_id=input_dim - 1,
                              short_cut=False, concat_hidden=False)
    out = jax.block_until_ready(out)

    ref = _reference_forward(params, residue_feature, num_residues,
                             padding=padding, padding_id=input_dim - 1)

    assert out["residue_feature"].shape == (total, hidden_dims[-1])
    assert out["graph_feature"].shape == (len(num_residues), hidden_dims[-1])
    np.testing.assert_allclose(np.asarray(out["graph_feature"]),
                               np.asarray(ref["graph_feature"]),
                               rtol=2e-2, atol=2e-2)
    np.testing.assert_allclose(np.asarray(out["residue_feature"]),
                               np.asarray(ref["residue_feature"]),
                               rtol=2e-2, atol=2e-2)
    print("KERNEL_OK")
</pallas_src>

<mosaic_0001>
module attributes {stable_mosaic.version = 11 : i64} {
  func.func @_fused_cnn_kernel(%arg0: i32, %arg1: memref<2xi32, #tpu.memory_space<smem>>, %arg2: memref<48x128xf32, #tpu.memory_space<vmem>>, %arg3: memref<2x3x128x128xf32, #tpu.memory_space<vmem>>, %arg4: memref<2x1x128xf32, #tpu.memory_space<vmem>>, %arg5: memref<48x128xf32, #tpu.memory_space<vmem>>, %arg6: memref<1x2x128xf32, #tpu.memory_space<vmem>>) attributes {dimension_semantics = [#tpu.dimension_semantics<parallel>], iteration_bounds = array<i64: 1>, scalar_prefetch = 1 : i64, scratch_operands = 0 : i64, tpu.core_type = #tpu.core_type<tc>, window_params = [{transform_indices = @transform_0, window_bounds = array<i64: 48, 128>}, {pipeline_mode = #tpu.pipeline_mode<synchronous>, transform_indices = @transform_1, window_bounds = array<i64: 2, 3, 128, 128>}, {pipeline_mode = #tpu.pipeline_mode<synchronous>, transform_indices = @transform_2, window_bounds = array<i64: 2, 1, 128>}, {transform_indices = @transform_3, window_bounds = array<i64: 48, 128>}, {transform_indices = @transform_4, window_bounds = array<i64: 1, 2, 128>}]} {
    %0 = tpu.iota {dimensions = array<i32: 1>} : vector<2x24x128xi32>
    %c16_i32 = arith.constant 16 : i32
    %1 = vector.broadcast %c16_i32 : i32 to vector<2x24x128xi32>
    %2 = arith.cmpi slt, %0, %1 : vector<2x24x128xi32>
    %c0 = arith.constant 0 : index
    %c0_0 = arith.constant 0 : index
    %3 = vector.load %arg2[%c0, %c0_0] : memref<48x128xf32, #tpu.memory_space<vmem>>, vector<48x128xf32>
    %cst = arith.constant 0.000000e+00 : f32
    %4 = vector.broadcast %cst : f32 to vector<48x128xf32>
    %c1_i32 = arith.constant 1 : i32
    %5 = tpu.dynamic_rotate %3 by %c1_i32 dim 0 : vector<48x128xf32>, i32 -> vector<48x128xf32>
    %c0_1 = arith.constant 0 : index
    %c0_2 = arith.constant 0 : index
    %c0_3 = arith.constant 0 : index
    %c0_4 = arith.constant 0 : index
    %6 = vector.load %arg3[%c0_1, %c0_2, %c0_3, %c0_4] : memref<2x3x128x128xf32, #tpu.memory_space<vmem>>, vector<1x1x128x128xf32>
    %7 = vector.shape_cast %6 : vector<1x1x128x128xf32> to vector<128x128xf32>
    %cst_5 = arith.constant dense<0.000000e+00> : vector<48x128xf32>
    %8 = tpu.matmul %5, %7, %cst_5 {dimension_numbers = #tpu.dot_dimension_numbers<[1], [0], [0], [1], [0, 0, 1, 1], [], []>} : vector<48x128xf32>, vector<128x128xf32>, vector<48x128xf32> -> vector<48x128xf32>
    %9 = arith.addf %4, %8 : vector<48x128xf32>
    %c0_6 = arith.constant 0 : index
    %c1 = arith.constant 1 : index
    %c0_7 = arith.constant 0 : index
    %c0_8 = arith.constant 0 : index
    %10 = vector.load %arg3[%c0_6, %c1, %c0_7, %c0_8] : memref<2x3x128x128xf32, #tpu.memory_space<vmem>>, vector<1x1x128x128xf32>
    %11 = vector.shape_cast %10 : vector<1x1x128x128xf32> to vector<128x128xf32>
    %cst_9 = arith.constant dense<0.000000e+00> : vector<48x128xf32>
    %12 = tpu.matmul %3, %11, %cst_9 {dimension_numbers = #tpu.dot_dimension_numbers<[1], [0], [0], [1], [0, 0, 1, 1], [], []>} : vector<48x128xf32>, vector<128x128xf32>, vector<48x128xf32> -> vector<48x128xf32>
    %13 = arith.addf %9, %12 : vector<48x128xf32>
    %c47_i32 = arith.constant 47 : i32
    %14 = tpu.dynamic_rotate %3 by %c47_i32 dim 0 : vector<48x128xf32>, i32 -> vector<48x128xf32>
    %c0_10 = arith.constant 0 : index
    %c2 = arith.constant 2 : index
    %c0_11 = arith.constant 0 : index
    %c0_12 = arith.constant 0 : index
    %15 = vector.load %arg3[%c0_10, %c2, %c0_11, %c0_12] : memref<2x3x128x128xf32, #tpu.memory_space<vmem>>, vector<1x1x128x128xf32>
    %16 = vector.shape_cast %15 : vector<1x1x128x128xf32> to vector<128x128xf32>
    %cst_13 = arith.constant dense<0.000000e+00> : vector<48x128xf32>
    %17 = tpu.matmul %14, %16, %cst_13 {dimension_numbers = #tpu.dot_dimension_numbers<[1], [0], [0], [1], [0, 0, 1, 1], [], []>} : vector<48x128xf32>, vector<128x128xf32>, vector<48x128xf32> -> vector<48x128xf32>
    %18 = arith.addf %13, %17 : vector<48x128xf32>
    %c0_14 = arith.constant 0 : index
    %c0_15 = arith.constant 0 : index
    %c0_16 = arith.constant 0 : index
    %19 = vector.load %arg4[%c0_14, %c0_15, %c0_16] : memref<2x1x128xf32, #tpu.memory_space<vmem>>, vector<1x1x128xf32>
    %20 = vector.shape_cast %19 : vector<1x1x128xf32> to vector<1x128xf32>
    %21 = vector.broadcast %20 : vector<1x128xf32> to vector<48x128xf32>
    %22 = arith.addf %18, %21 : vector<48x128xf32>
    %cst_17 = arith.constant 0.000000e+00 : f32
    %23 = vector.broadcast %cst_17 : f32 to vector<48x128xf32>
    %24 = arith.maximumf %22, %23 : vector<48x128xf32>
    %25 = vector.shape_cast %24 : vector<48x128xf32> to vector<2x24x128xf32>
    %cst_18 = arith.constant 0.000000e+00 : f32
    %26 = vector.broadcast %cst_18 : f32 to vector<2x24x128xf32>
    %27 = arith.select %2, %25, %26 : vector<2x24x128xi1>, vector<2x24x128xf32>
    %28 = vector.shape_cast %27 : vector<2x24x128xf32> to vector<48x128xf32>
    %cst_19 = arith.constant 0.000000e+00 : f32
    %29 = vector.broadcast %cst_19 : f32 to vector<48x128xf32>
    %c1_i32_20 = arith.constant 1 : i32
    %30 = tpu.dynamic_rotate %28 by %c1_i32_20 dim 0 : vector<48x128xf32>, i32 -> vector<48x128xf32>
    %c1_21 = arith.constant 1 : index
    %c0_22 = arith.constant 0 : index
    %c0_23 = arith.constant 0 : index
    %c0_24 = arith.constant 0 : index
    %31 = vector.load %arg3[%c1_21, %c0_22, %c0_23, %c0_24] : memref<2x3x128x128xf32, #tpu.memory_space<vmem>>, vector<1x1x128x128xf32>
    %32 = vector.shape_cast %31 : vector<1x1x128x128xf32> to vector<128x128xf32>
    %cst_25 = arith.constant dense<0.000000e+00> : vector<48x128xf32>
    %33 = tpu.matmul %30, %32, %cst_25 {dimension_numbers = #tpu.dot_dimension_numbers<[1], [0], [0], [1], [0, 0, 1, 1], [], []>} : vector<48x128xf32>, vector<128x128xf32>, vector<48x128xf32> -> vector<48x128xf32>
    %34 = arith.addf %29, %33 : vector<48x128xf32>
    %c1_26 = arith.constant 1 : index
    %c1_27 = arith.constant 1 : index
    %c0_28 = arith.constant 0 : index
    %c0_29 = arith.constant 0 : index
    %35 = vector.load %arg3[%c1_26, %c1_27, %c0_28, %c0_29] : memref<2x3x128x128xf32, #tpu.memory_space<vmem>>, vector<1x1x128x128xf32>
    %36 = vector.shape_cast %35 : vector<1x1x128x128xf32> to vector<128x128xf32>
    %cst_30 = arith.constant dense<0.000000e+00> : vector<48x128xf32>
    %37 = tpu.matmul %28, %36, %cst_30 {dimension_numbers = #tpu.dot_dimension_numbers<[1], [0], [0], [1], [0, 0, 1, 1], [], []>} : vector<48x128xf32>, vector<128x128xf32>, vector<48x128xf32> -> vector<48x128xf32>
    %38 = arith.addf %34, %37 : vector<48x128xf32>
    %c47_i32_31 = arith.constant 47 : i32
    %39 = tpu.dynamic_rotate %28 by %c47_i32_31 dim 0 : vector<48x128xf32>, i32 -> vector<48x128xf32>
    %c1_32 = arith.constant 1 : index
    %c2_33 = arith.constant 2 : index
    %c0_34 = arith.constant 0 : index
    %c0_35 = arith.constant 0 : index
    %40 = vector.load %arg3[%c1_32, %c2_33, %c0_34, %c0_35] : memref<2x3x128x128xf32, #tpu.memory_space<vmem>>, vector<1x1x128x128xf32>
    %41 = vector.shape_cast %40 : vector<1x1x128x128xf32> to vector<128x128xf32>
    %cst_36 = arith.constant dense<0.000000e+00> : vector<48x128xf32>
    %42 = tpu.matmul %39, %41, %cst_36 {dimension_numbers = #tpu.dot_dimension_numbers<[1], [0], [0], [1], [0, 0, 1, 1], [], []>} : vector<48x128xf32>, vector<128x128xf32>, vector<48x128xf32> -> vector<48x128xf32>
    %43 = arith.addf %38, %42 : vector<48x128xf32>
    %c1_37 = arith.constant 1 : index
    %c0_38 = arith.constant 0 : index
    %c0_39 = arith.constant 0 : index
    %44 = vector.load %arg4[%c1_37, %c0_38, %c0_39] : memref<2x1x128xf32, #tpu.memory_space<vmem>>, vector<1x1x128xf32>
    %45 = vector.shape_cast %44 : vector<1x1x128xf32> to vector<1x128xf32>
    %46 = vector.broadcast %45 : vector<1x128xf32> to vector<48x128xf32>
    %47 = arith.addf %43, %46 : vector<48x128xf32>
    %cst_40 = arith.constant 0.000000e+00 : f32
    %48 = vector.broadcast %cst_40 : f32 to vector<48x128xf32>
    %49 = arith.maximumf %47, %48 : vector<48x128xf32>
    %50 = vector.shape_cast %49 : vector<48x128xf32> to vector<2x24x128xf32>
    %cst_41 = arith.constant 0.000000e+00 : f32
    %51 = vector.broadcast %cst_41 : f32 to vector<2x24x128xf32>
    %52 = arith.select %2, %50, %51 : vector<2x24x128xi1>, vector<2x24x128xf32>
    %53 = vector.shape_cast %52 : vector<2x24x128xf32> to vector<48x128xf32>
    %c0_42 = arith.constant 0 : index
    %c0_43 = arith.constant 0 : index
    %54 = vector.load %arg5[%c0_42, %c0_43] : memref<48x128xf32, #tpu.memory_space<vmem>>, vector<48x128xf32>
    tpu.vector_store %arg5[%c0_42, %c0_43], %53 {strides = array<i32>} : memref<48x128xf32, #tpu.memory_space<vmem>>, vector<48x128xf32>,
    %55 = tpu.iota {dimensions = array<i32: 0>} : vector<24x128xi32>
    %c2_i32 = arith.constant 2 : i32
    %56 = arith.muli %arg0, %c2_i32 : i32
    %c0_i32 = arith.constant 0 : i32
    %57 = arith.addi %56, %c0_i32 : i32
    %58 = arith.index_cast %57 : i32 to index
    %59 = memref.load %arg1[%58] : memref<2xi32, #tpu.memory_space<smem>>
    %60 = vector.extract_strided_slice %53 {offsets = [0, 0], sizes = [24, 128], strides = [1, 1]} : vector<48x128xf32> to vector<24x128xf32>
    %61 = vector.broadcast %59 : i32 to vector<24x128xi32>
    %62 = arith.cmpi slt, %55, %61 : vector<24x128xi32>
    %cst_44 = arith.constant 0xFF800000 : f32
    %63 = vector.broadcast %cst_44 : f32 to vector<24x128xf32>
    %64 = arith.select %62, %60, %63 : vector<24x128xi1>, vector<24x128xf32>
    %cst_45 = arith.constant dense<0xFF800000> : vector<128xf32>
    %65 = vector.multi_reduction <maximumf>, %64, %cst_45 [0] : vector<24x128xf32> to vector<128xf32>
    %66 = vector.shape_cast %65 : vector<128xf32> to vector<1x128xf32>
    %c0_i32_46 = arith.constant 0 : i32
    %67 = arith.cmpi sgt, %59, %c0_i32_46 : i32
    %cst_47 = arith.constant 0.000000e+00 : f32
    %68 = vector.broadcast %cst_47 : f32 to vector<1x128xf32>
    %69 = arith.select %67, %66, %68 : vector<1x128xf32>
    %c0_48 = arith.constant 0 : index
    %c0_49 = arith.constant 0 : index
    %c0_50 = arith.constant 0 : index
    %70 = vector.load %arg6[%c0_48, %c0_49, %c0_50] : memref<1x2x128xf32, #tpu.memory_space<vmem>>, vector<1x1x128xf32>
    %71 = vector.shape_cast %70 : vector<1x1x128xf32> to vector<1x128xf32>
    %72 = vector.shape_cast %69 : vector<1x128xf32> to vector<1x1x128xf32>
    tpu.vector_store %arg6[%c0_48, %c0_49, %c0_50], %72 {strides = array<i32>} : memref<1x2x128xf32, #tpu.memory_space<vmem>>, vector<1x1x128xf32>,
    %c2_i32_51 = arith.constant 2 : i32
    %73 = arith.muli %arg0, %c2_i32_51 : i32
    %c1_i32_52 = arith.constant 1 : i32
    %74 = arith.addi %73, %c1_i32_52 : i32
    %75 = arith.index_cast %74 : i32 to index
    %76 = memref.load %arg1[%75] : memref<2xi32, #tpu.memory_space<smem>>
    %77 = vector.extract_strided_slice %53 {offsets = [24, 0], sizes = [24, 128], strides = [1, 1]} : vector<48x128xf32> to vector<24x128xf32>
    %78 = vector.broadcast %76 : i32 to vector<24x128xi32>
    %79 = arith.cmpi slt, %55, %78 : vector<24x128xi32>
    %cst_53 = arith.constant 0xFF800000 : f32
    %80 = vector.broadcast %cst_53 : f32 to vector<24x128xf32>
    %81 = arith.select %79, %77, %80 : vector<24x128xi1>, vector<24x128xf32>
    %cst_54 = arith.constant dense<0xFF800000> : vector<128xf32>
    %82 = vector.multi_reduction <maximumf>, %81, %cst_54 [0] : vector<24x128xf32> to vector<128xf32>
    %83 = vector.shape_cast %82 : vector<128xf32> to vector<1x128xf32>
    %c0_i32_55 = arith.constant 0 : i32
    %84 = arith.cmpi sgt, %76, %c0_i32_55 : i32
    %cst_56 = arith.constant 0.000000e+00 : f32
    %85 = vector.broadcast %cst_56 : f32 to vector<1x128xf32>
    %86 = arith.select %84, %83, %85 : vector<1x128xf32>
    %c0_57 = arith.constant 0 : index
    %c1_58 = arith.constant 1 : index
    %c0_59 = arith.constant 0 : index
    %87 = vector.load %arg6[%c0_57, %c1_58, %c0_59] : memref<1x2x128xf32, #tpu.memory_space<vmem>>, vector<1x1x128xf32>
    %88 = vector.shape_cast %87 : vector<1x1x128xf32> to vector<1x128xf32>
    %89 = vector.shape_cast %86 : vector<1x128xf32> to vector<1x1x128xf32>
    tpu.vector_store %arg6[%c0_57, %c1_58, %c0_59], %89 {strides = array<i32>} : memref<1x2x128xf32, #tpu.memory_space<vmem>>, vector<1x1x128xf32>,
    return
  }
  func.func @transform_0(%arg0: i32, %arg1: memref<2xi32, #tpu.memory_space<smem>>) -> (i32, i32) {
    %c0_i32 = arith.constant 0 : i32
    %c0_i32_0 = arith.constant 0 : i32
    return %arg0, %c0_i32 : i32, i32
  }
  func.func @transform_1(%arg0: i32, %arg1: memref<2xi32, #tpu.memory_space<smem>>) -> (i32, i32, i32, i32) {
    %c0_i32 = arith.constant 0 : i32
    %c0_i32_0 = arith.constant 0 : i32
    %c0_i32_1 = arith.constant 0 : i32
    %c0_i32_2 = arith.constant 0 : i32
    %c0_i32_3 = arith.constant 0 : i32
    return %c0_i32, %c0_i32_0, %c0_i32_1, %c0_i32_2 : i32, i32, i32, i32
  }
  func.func @transform_2(%arg0: i32, %arg1: memref<2xi32, #tpu.memory_space<smem>>) -> (i32, i32, i32) {
    %c0_i32 = arith.constant 0 : i32
    %c0_i32_0 = arith.constant 0 : i32
    %c0_i32_1 = arith.constant 0 : i32
    %c0_i32_2 = arith.constant 0 : i32
    return %c0_i32, %c0_i32_0, %c0_i32_1 : i32, i32, i32
  }
  func.func @transform_3(%arg0: i32, %arg1: memref<2xi32, #tpu.memory_space<smem>>) -> (i32, i32) {
    %c0_i32 = arith.constant 0 : i32
    %c0_i32_0 = arith.constant 0 : i32
    return %arg0, %c0_i32 : i32, i32
  }
  func.func @transform_4(%arg0: i32, %arg1: memref<2xi32, #tpu.memory_space<smem>>) -> (i32, i32, i32) {
    %c0_i32 = arith.constant 0 : i32
    %c0_i32_0 = arith.constant 0 : i32
    %c0_i32_1 = arith.constant 0 : i32
    return %arg0, %c0_i32, %c0_i32_0 : i32, i32, i32
  }
}

</mosaic_0001>

<llo_original>
// kernel: tpu_custom_call.1
$region0: #{tpu_custom_call.1}
  #allocation0 [shape = 'u32[]', space=smem, size = 0x4, offset = 0x4, fixed_abs, tag = 'smem constant byte address 0x4 - core index']
  #allocation1 [shape = 'u32[144,128]{1,0:T(1,128)}', space=vmem, size = 0x12000, scoped, tag = 'internal scratch']
  #allocation2 [shape = 's32[1]{0}', space=sflag, size = 0x4, scoped, tag = 'scoped memory for tpu_custom_call.1']
  #allocation3 [shape = 'u8[512]{0}', space=smem, size = 0x200, scoped, tag = 'prefetched SMEM operand 0']
  %s0 = inlined_call_operand.hbm [shape: s32[2], index: 0, kind: input, shape index: {}]
  %s1 = inlined_call_operand.hbm [shape: f32[48,128], index: 1, kind: input, shape index: {}]
  %s2 = inlined_call_operand.hbm [shape: f32[2,3,128,128], index: 2, kind: input, shape index: {}]
  %s3 = inlined_call_operand.vmem [shape: f32[2,1,128], index: 3, kind: input, shape index: {}]
  %s4 = inlined_call_operand.hbm [shape: f32[48,128], index: 4, kind: output, shape index: {0}]
  %s5 = inlined_call_operand.hbm [shape: f32[1,2,128], index: 5, kind: output, shape index: {1}]
  %6 = xla_tuple %s4, %s5
  %s7 = sld [smem:[#allocation0]]
  $region38: #{tpu_custom_call.1} parent=0
    _
  %s9 = ssub.s32 1, %s7
  %s10 = scalar_select 0, %s9, %s7
  %12 = dma.hbm_to_smem %s0, 16, [#allocation3], [#allocation2]
  %13 = dma.done [#allocation2], 16
  %14 = sfence
  $region1: #{tpu_custom_call.1} parent=0
    #allocation4 [shape = 'u8[24576]{0}', space=vmem, size = 0x6000, scoped, tag = 'input window, operand 1, single buffered']
    #allocation5 [shape = 's32[1]{0}', space=sflag, size = 0x4, scoped, tag = 'scoped memory for tpu_custom_call.1']
    #allocation6 [shape = 's32[1]{0}', space=sflag, size = 0x4, scoped, tag = 'scoped memory for tpu_custom_call.1']
    #allocation7 [shape = 'u8[393216]{0}', space=vmem, size = 0x60000, scoped, tag = 'input window, operand 2, single buffered']
    #allocation8 [shape = 's32[1]{0}', space=sflag, size = 0x4, scoped, tag = 'scoped memory for tpu_custom_call.1']
    #allocation9 [shape = 'u8[24576]{0}', space=vmem, size = 0x6000, scoped, tag = 'output window, operand 0, single buffered']
    #allocation10 [shape = 'u8[1024]{0}', space=vmem, size = 0x400, scoped, tag = 'output window, operand 1, single buffered']
    #allocation11 [shape = 's32[1]{0}', space=sflag, size = 0x4, scoped, tag = 'scoped memory for tpu_custom_call.1']
    %15 = vsyncpa [#allocation5], 0
    %16 = vsyncpa [#allocation8], 0
    %17 = vsyncpa [#allocation6], 0
    %18 = vsyncpa [#allocation11], 0
    // Predicated region
    $region2: #{tpu_custom_call.1} parent=1 // pred_check
      _
    $region3: #{tpu_custom_call.1} parent=1 // pred_check_branch
      %20 = sbr.rel (0) target = $region5
    $region4: #{tpu_custom_call.1} parent=1 // pred_region
      %s22 = ssub.s32 768, 768
      %23 = vsyncadd [#allocation5], %s22
      %s24 = sshll.u32 [#allocation4], 4
      %s25 = int_to_ptr.vmem [resolvable:$true] %s24
      %30 = dma.hbm_to_vmem [thread:$0]  %s1, 768, %s25, [#allocation5], 128, 128, 8
    $region5: #{tpu_custom_call.1} parent=1 // pred_fallthru
      _
    // Predicated region
    $region6: #{tpu_custom_call.1} parent=1 // pred_check
      _
    $region7: #{tpu_custom_call.1} parent=1 // pred_check_branch
      %32 = sbr.rel (0) target = $region9
    $region8: #{tpu_custom_call.1} parent=1 // pred_region
      %s34 = ssub.s32 12288, 12288
      %35 = vsyncadd [#allocation8], %s34
      %s36 = sshll.u32 [#allocation7], 4
      %s37 = int_to_ptr.vmem [resolvable:$true] %s36
      %42 = dma.hbm_to_vmem [thread:$0]  %s2, 12288, %s37, [#allocation8], 128, 128, 8
    $region9: #{tpu_custom_call.1} parent=1 // pred_fallthru
      _
    // Predicated region
    $region10: #{tpu_custom_call.1} parent=1 // pred_check
      _
    $region11: #{tpu_custom_call.1} parent=1 // pred_check_branch
      %44 = sbr.rel (0) target = $region13
    $region12: #{tpu_custom_call.1} parent=1 // pred_region
      _
    $region13: #{tpu_custom_call.1} parent=1 // pred_fallthru
      _
    // Predicated region
    $region14: #{tpu_custom_call.1} parent=1 // pred_check
      _
    $region15: #{tpu_custom_call.1} parent=1 // pred_check_branch
      %46 = sbr.rel (0) target = $region17
    $region16: #{tpu_custom_call.1} parent=1 // pred_region
      %47 = dma.done [#allocation5], 768
    $region17: #{tpu_custom_call.1} parent=1 // pred_fallthru
      _
    // Predicated region
    $region18: #{tpu_custom_call.1} parent=1 // pred_check
      _
    $region19: #{tpu_custom_call.1} parent=1 // pred_check_branch
      %49 = sbr.rel (0) target = $region21
    $region20: #{tpu_custom_call.1} parent=1 // pred_region
      %50 = dma.done [#allocation8], 12288
    $region21: #{tpu_custom_call.1} parent=1 // pred_fallthru
      _
    %v51 = vlaneseq
    %v52 = vshrl.u32 %v51, 7
    %v53 = vadd.s32 %v52, 8
    %v54 = vadd.s32 %v52, 16
    %vm55 = vcmp.lt.s32.totalorder %v52, 16
    %vm56 = vcmp.lt.s32.totalorder %v53, 16
    %vm57 = vcmp.lt.s32.totalorder %v54, 16
    %v58 = vld [vmem:[#allocation4] sm:$0xff]
    %v59 = vld [vmem:[#allocation4 + $0x8] sm:$0xff]
    %v60 = vld [vmem:[#allocation4 + $0x10] sm:$0xff]
    %v61 = vld [vmem:[#allocation4 + $0x18] sm:$0xff]
    %v62 = vld [vmem:[#allocation4 + $0x20] sm:$0xff]
    %v63 = vld [vmem:[#allocation4 + $0x28] sm:$0xff]
    %v64 = vrot.slane %v58, 7
    %v65 = vrot.slane %v59, 7
    %v66 = vrot.slane %v60, 7
    %v67 = vrot.slane %v61, 7
    %v68 = vrot.slane %v62, 7
    %v69 = vrot.slane %v63, 7
    %vm70 = vcmp.lt.s32.totalorder %v52, 1
    %v71 = vsel %vm70, %v68, %v69
    %v72 = vsel %vm70, %v67, %v68
    %v73 = vsel %vm70, %v66, %v67
    %v74 = vsel %vm70, %v65, %v66
    %v75 = vsel %vm70, %v64, %v65
    %v76 = vsel %vm70, %v69, %v64
    %v77 = vld [vmem:[#allocation7] sm:$0xff]
    %v78 = vld [vmem:[#allocation7 + $0x8] sm:$0xff]
    %v79 = vld [vmem:[#allocation7 + $0x10] sm:$0xff]
    %v80 = vld [vmem:[#allocation7 + $0x18] sm:$0xff]
    %v81 = vld [vmem:[#allocation7 + $0x20] sm:$0xff]
    %v82 = vld [vmem:[#allocation7 + $0x28] sm:$0xff]
    %v83 = vld [vmem:[#allocation7 + $0x30] sm:$0xff]
    %v84 = vld [vmem:[#allocation7 + $0x38] sm:$0xff]
    %v85 = vld [vmem:[#allocation7 + $0x40] sm:$0xff]
    %v86 = vld [vmem:[#allocation7 + $0x48] sm:$0xff]
    %v87 = vld [vmem:[#allocation7 + $0x50] sm:$0xff]
    %v88 = vld [vmem:[#allocation7 + $0x58] sm:$0xff]
    %v89 = vld [vmem:[#allocation7 + $0x60] sm:$0xff]
    %v90 = vld [vmem:[#allocation7 + $0x68] sm:$0xff]
    %v91 = vld [vmem:[#allocation7 + $0x70] sm:$0xff]
    %v92 = vld [vmem:[#allocation7 + $0x78] sm:$0xff]
    %s93 = scalar_lea.vmem [#allocation7], 128
    %v94 = vld [vmem:[%s93] sm:$0xff]
    %v95 = vld [vmem:[%s93 + $0x8] sm:$0xff]
    %v96 = vld [vmem:[%s93 + $0x10] sm:$0xff]
    %v97 = vld [vmem:[%s93 + $0x18] sm:$0xff]
    %v98 = vld [vmem:[%s93 + $0x20] sm:$0xff]
    %v99 = vld [vmem:[%s93 + $0x28] sm:$0xff]
    %v100 = vld [vmem:[%s93 + $0x30] sm:$0xff]
    %v101 = vld [vmem:[%s93 + $0x38] sm:$0xff]
    %v102 = vld [vmem:[%s93 + $0x40] sm:$0xff]
    %v103 = vld [vmem:[%s93 + $0x48] sm:$0xff]
    %v104 = vld [vmem:[%s93 + $0x50] sm:$0xff]
    %v105 = vld [vmem:[%s93 + $0x58] sm:$0xff]
    %v106 = vld [vmem:[%s93 + $0x60] sm:$0xff]
    %v107 = vld [vmem:[%s93 + $0x68] sm:$0xff]
    %v108 = vld [vmem:[%s93 + $0x70] sm:$0xff]
    %v109 = vld [vmem:[%s93 + $0x78] sm:$0xff]
    %110 = vmatprep.subr.mxu0 0.0
    %111 = vmatpush1.msra.mxu0 %v94
    %112 = vmatprep.subr.mxu0 0.0
    %113 = vmatpush1.msra.mxu0 %v95
    %114 = vmatprep.subr.mxu0 0.0
    %115 = vmatpush1.msra.mxu0 %v96
    %116 = vmatprep.subr.mxu0 0.0
    %117 = vmatpush1.msra.mxu0 %v97
    %118 = vmatprep.subr.mxu0 0.0
    %119 = vmatpush1.msra.mxu0 %v98
    %120 = vmatprep.subr.mxu0 0.0
    %121 = vmatpush1.msra.mxu0 %v99
    %122 = vmatprep.subr.mxu0 0.0
    %123 = vmatpush1.msra.mxu0 %v100
    %124 = vmatprep.subr.mxu0 0.0
    %125 = vmatpush1.msra.mxu0 %v101
    %126 = vmatprep.subr.mxu0 0.0
    %127 = vmatpush1.msra.mxu0 %v102
    %128 = vmatprep.subr.mxu0 0.0
    %129 = vmatpush1.msra.mxu0 %v103
    %130 = vmatprep.subr.mxu0 0.0
    %131 = vmatpush1.msra.mxu0 %v104
    %132 = vmatprep.subr.mxu0 0.0
    %133 = vmatpush1.msra.mxu0 %v105
    %134 = vmatprep.subr.mxu0 0.0
    %135 = vmatpush1.msra.mxu0 %v106
    %136 = vmatprep.subr.mxu0 0.0
    %137 = vmatpush1.msra.mxu0 %v107
    %138 = vmatprep.subr.mxu0 0.0
    %139 = vmatpush1.msra.mxu0 %v108
    %140 = vmatprep.subr.mxu0 0.0
    %141 = vmatpush1.msra.mxu0 %v109
    %142 = vmatprep.subr.mxu0 0.0
    %143 = vmatpush1.msra.mxu0 0.0
    %144 = vmatprep.subr.mxu0 0.0
    %145 = vmatpush1.msra.mxu0 0.0
    %146 = vmatprep.subr.mxu0 0.0
    %147 = vmatpush1.msra.mxu0 0.0
    %148 = vmatprep.subr.mxu0 0.0
    %149 = vmatpush1.msra.mxu0 0.0
    %150 = vmatprep.subr.mxu0 0.0
    %151 = vmatpush1.msra.mxu0 0.0
    %152 = vmatprep.subr.mxu0 0.0
    %153 = vmatpush1.msra.mxu0 0.0
    %154 = vmatprep.subr.mxu0 0.0
    %155 = vmatpush1.msra.mxu0 0.0
    %156 = vmatprep.subr.mxu0 0.0
    %157 = vmatpush1.msra.mxu0 0.0
    %158 = vmatprep.subr.mxu0 0.0
    %159 = vmatpush1.msra.mxu0 0.0
    %160 = vmatprep.subr.mxu0 0.0
    %161 = vmatpush1.msra.mxu0 0.0
    %162 = vmatprep.subr.mxu0 0.0
    %163 = vmatpush1.msra.mxu0 0.0
    %164 = vmatprep.subr.mxu0 0.0
    %165 = vmatpush1.msra.mxu0 0.0
    %166 = vmatprep.subr.mxu0 0.0
    %167 = vmatpush1.msra.mxu0 0.0
    %168 = vmatprep.subr.mxu0 0.0
    %169 = vmatpush1.msra.mxu0 0.0
    %170 = vmatprep.subr.mxu0 0.0
    %171 = vmatpush1.msra.mxu0 0.0
    %172 = vmatprep.subr.mxu0 0.0
    %173 = vmatpush1.msra.mxu0 0.0
    %174 = vmatprep.mubr.f32.mxu0 0.0
    %175 = vmatmul.mubr.f32.gmra.mrb[0].mxu0 %v58
    %v176 = vpop.f32.mrb[0].mxu0
    %v177 = vadd.f32 0.0, %v176
    %v178 = vpop.f32.mrb[0].mxu0
    %179 = vmatprep.mubr.f32.mxu0 0.0
    %180 = vmatmul.mubr.f32.gmra.mrb[0].mxu0 %v59
    %v181 = vpop.f32.mrb[0].mxu0
    %v182 = vadd.f32 0.0, %v181
    %v183 = vpop.f32.mrb[0].mxu0
    %184 = vmatprep.mubr.f32.mxu0 0.0
    %185 = vmatmul.mubr.f32.gmra.mrb[0].mxu0 %v60
    %v186 = vpop.f32.mrb[0].mxu0
    %v187 = vadd.f32 0.0, %v186
    %v188 = vpop.f32.mrb[0].mxu0
    %189 = vmatprep.mubr.f32.mxu0 0.0
    %190 = vmatmul.mubr.f32.gmra.mrb[0].mxu0 %v61
    %v191 = vpop.f32.mrb[0].mxu0
    %v192 = vadd.f32 0.0, %v191
    %v193 = vpop.f32.mrb[0].mxu0
    %194 = vmatprep.mubr.f32.mxu0 0.0
    %195 = vmatmul.mubr.f32.gmra.mrb[0].mxu0 %v62
    %v196 = vpop.f32.mrb[0].mxu0
    %v197 = vadd.f32 0.0, %v196
    %v198 = vpop.f32.mrb[0].mxu0
    %199 = vmatprep.mubr.f32.mxu0 0.0
    %200 = vmatmul.mubr.f32.gmra.mrb[0].mxu0 %v63
    %v201 = vpop.f32.mrb[0].mxu0
    %v202 = vadd.f32 0.0, %v201
    %v203 = vpop.f32.mrb[0].mxu0
    %204 = vdwg.mxu0
    %205 = vmatprep.subr.mxu0 0.0
    %206 = vmatpush1.msra.mxu0 %v77
    %207 = vmatprep.subr.mxu0 0.0
    %208 = vmatpush1.msra.mxu0 %v78
    %209 = vmatprep.subr.mxu0 0.0
    %210 = vmatpush1.msra.mxu0 %v79
    %211 = vmatprep.subr.mxu0 0.0
    %212 = vmatpush1.msra.mxu0 %v80
    %213 = vmatprep.subr.mxu0 0.0
    %214 = vmatpush1.msra.mxu0 %v81
    %215 = vmatprep.subr.mxu0 0.0
    %216 = vmatpush1.msra.mxu0 %v82
    %217 = vmatprep.subr.mxu0 0.0
    %218 = vmatpush1.msra.mxu0 %v83
    %219 = vmatprep.subr.mxu0 0.0
    %220 = vmatpush1.msra.mxu0 %v84
    %221 = vmatprep.subr.mxu0 0.0
    %222 = vmatpush1.msra.mxu0 %v85
    %223 = vmatprep.subr.mxu0 0.0
    %224 = vmatpush1.msra.mxu0 %v86
    %225 = vmatprep.subr.mxu0 0.0
    %226 = vmatpush1.msra.mxu0 %v87
    %227 = vmatprep.subr.mxu0 0.0
    %228 = vmatpush1.msra.mxu0 %v88
    %229 = vmatprep.subr.mxu0 0.0
    %230 = vmatpush1.msra.mxu0 %v89
    %231 = vmatprep.subr.mxu0 0.0
    %232 = vmatpush1.msra.mxu0 %v90
    %233 = vmatprep.subr.mxu0 0.0
    %234 = vmatpush1.msra.mxu0 %v91
    %235 = vmatprep.subr.mxu0 0.0
    %236 = vmatpush1.msra.mxu0 %v92
    %237 = vmatprep.subr.mxu0 0.0
    %238 = vmatpush1.msra.mxu0 0.0
    %239 = vmatprep.subr.mxu0 0.0
    %240 = vmatpush1.msra.mxu0 0.0
    %241 = vmatprep.subr.mxu0 0.0
    %242 = vmatpush1.msra.mxu0 0.0
    %243 = vmatprep.subr.mxu0 0.0
    %244 = vmatpush1.msra.mxu0 0.0
    %245 = vmatprep.subr.mxu0 0.0
    %246 = vmatpush1.msra.mxu0 0.0
    %247 = vmatprep.subr.mxu0 0.0
    %248 = vmatpush1.msra.mxu0 0.0
    %249 = vmatprep.subr.mxu0 0.0
    %250 = vmatpush1.msra.mxu0 0.0
    %251 = vmatprep.subr.mxu0 0.0
    %252 = vmatpush1.msra.mxu0 0.0
    %253 = vmatprep.subr.mxu0 0.0
    %254 = vmatpush1.msra.mxu0 0.0
    %255 = vmatprep.subr.mxu0 0.0
    %256 = vmatpush1.msra.mxu0 0.0
    %257 = vmatprep.subr.mxu0 0.0
    %258 = vmatpush1.msra.mxu0 0.0
    %259 = vmatprep.subr.mxu0 0.0
    %260 = vmatpush1.msra.mxu0 0.0
    %261 = vmatprep.subr.mxu0 0.0
    %262 = vmatpush1.msra.mxu0 0.0
    %263 = vmatprep.subr.mxu0 0.0
    %264 = vmatpush1.msra.mxu0 0.0
    %265 = vmatprep.subr.mxu0 0.0
    %266 = vmatpush1.msra.mxu0 0.0
    %267 = vmatprep.subr.mxu0 0.0
    %268 = vmatpush1.msra.mxu0 0.0
    %269 = vmatprep.mubr.f32.mxu0 0.0
    %270 = vmatmul.mubr.f32.gmra.mrb[0].mxu0 %v76
    %v271 = vpop.f32.mrb[0].mxu0
    %v272 = vadd.f32 %v177, %v271
    %v273 = vpop.f32.mrb[0].mxu0
    %274 = vmatprep.mubr.f32.mxu0 0.0
    %275 = vmatmul.mubr.f32.gmra.mrb[0].mxu0 %v75
    %v276 = vpop.f32.mrb[0].mxu0
    %v277 = vadd.f32 %v182, %v276
    %v278 = vpop.f32.mrb[0].mxu0
    %279 = vmatprep.mubr.f32.mxu0 0.0
    %280 = vmatmul.mubr.f32.gmra.mrb[0].mxu0 %v74
    %v281 = vpop.f32.mrb[0].mxu0
    %v282 = vadd.f32 %v187, %v281
    %v283 = vpop.f32.mrb[0].mxu0
    %284 = vmatprep.mubr.f32.mxu0 0.0
    %285 = vmatmul.mubr.f32.gmra.mrb[0].mxu0 %v73
    %v286 = vpop.f32.mrb[0].mxu0
    %v287 = vadd.f32 %v192, %v286
    %v288 = vpop.f32.mrb[0].mxu0
    %289 = vmatprep.mubr.f32.mxu0 0.0
    %290 = vmatmul.mubr.f32.gmra.mrb[0].mxu0 %v72
    %v291 = vpop.f32.mrb[0].mxu0
    %v292 = vadd.f32 %v197, %v291
    %v293 = vpop.f32.mrb[0].mxu0
    %294 = vmatprep.mubr.f32.mxu0 0.0
    %295 = vmatmul.mubr.f32.gmra.mrb[0].mxu0 %v71
    %v296 = vpop.f32.mrb[0].mxu0
    %v297 = vadd.f32 %v202, %v296
    %v298 = vpop.f32.mrb[0].mxu0
    %299 = vdwg.mxu0
    %v300 = vrot.slane %v58, 1
    %v301 = vrot.slane %v59, 1
    %v302 = vrot.slane %v60, 1
    %v303 = vrot.slane %v61, 1
    %v304 = vrot.slane %v62, 1
    %v305 = vrot.slane %v63, 1
    %vm306 = vcmp.lt.s32.totalorder %v52, 7
    %v307 = vsel %vm306, %v304, %v305
    %v308 = vsel %vm306, %v303, %v304
    %v309 = vsel %vm306, %v302, %v303
    %v310 = vsel %vm306, %v301, %v302
    %v311 = vsel %vm306, %v300, %v301
    %v312 = vsel %vm306, %v305, %v300
    %s313 = scalar_lea.vmem [#allocation7], 256
    %v314 = vld [vmem:[%s313] sm:$0xff]
    %v315 = vld [vmem:[%s313 + $0x8] sm:$0xff]
    %v316 = vld [vmem:[%s313 + $0x10] sm:$0xff]
    %v317 = vld [vmem:[%s313 + $0x18] sm:$0xff]
    %v318 = vld [vmem:[%s313 + $0x20] sm:$0xff]
    %v319 = vld [vmem:[%s313 + $0x28] sm:$0xff]
    %v320 = vld [vmem:[%s313 + $0x30] sm:$0xff]
    %v321 = vld [vmem:[%s313 + $0x38] sm:$0xff]
    %v322 = vld [vmem:[%s313 + $0x40] sm:$0xff]
    %v323 = vld [vmem:[%s313 + $0x48] sm:$0xff]
    %v324 = vld [vmem:[%s313 + $0x50] sm:$0xff]
    %v325 = vld [vmem:[%s313 + $0x58] sm:$0xff]
    %v326 = vld [vmem:[%s313 + $0x60] sm:$0xff]
    %v327 = vld [vmem:[%s313 + $0x68] sm:$0xff]
    %v328 = vld [vmem:[%s313 + $0x70] sm:$0xff]
    %v329 = vld [vmem:[%s313 + $0x78] sm:$0xff]
    %330 = vmatprep.subr.mxu0 0.0
    %331 = vmatpush1.msra.mxu0 %v314
    %332 = vmatprep.subr.mxu0 0.0
    %333 = vmatpush1.msra.mxu0 %v315
    %334 = vmatprep.subr.mxu0 0.0
    %335 = vmatpush1.msra.mxu0 %v316
    %336 = vmatprep.subr.mxu0 0.0
    %337 = vmatpush1.msra.mxu0 %v317
    %338 = vmatprep.subr.mxu0 0.0
    %339 = vmatpush1.msra.mxu0 %v318
    %340 = vmatprep.subr.mxu0 0.0
    %341 = vmatpush1.msra.mxu0 %v319
    %342 = vmatprep.subr.mxu0 0.0
    %343 = vmatpush1.msra.mxu0 %v320
    %344 = vmatprep.subr.mxu0 0.0
    %345 = vmatpush1.msra.mxu0 %v321
    %346 = vmatprep.subr.mxu0 0.0
    %347 = vmatpush1.msra.mxu0 %v322
    %348 = vmatprep.subr.mxu0 0.0
    %349 = vmatpush1.msra.mxu0 %v323
    %350 = vmatprep.subr.mxu0 0.0
    %351 = vmatpush1.msra.mxu0 %v324
    %352 = vmatprep.subr.mxu0 0.0
    %353 = vmatpush1.msra.mxu0 %v325
    %354 = vmatprep.subr.mxu0 0.0
    %355 = vmatpush1.msra.mxu0 %v326
    %356 = vmatprep.subr.mxu0 0.0
    %357 = vmatpush1.msra.mxu0 %v327
    %358 = vmatprep.subr.mxu0 0.0
    %359 = vmatpush1.msra.mxu0 %v328
    %360 = vmatprep.subr.mxu0 0.0
    %361 = vmatpush1.msra.mxu0 %v329
    %362 = vmatprep.subr.mxu0 0.0
    %363 = vmatpush1.msra.mxu0 0.0
    %364 = vmatprep.subr.mxu0 0.0
    %365 = vmatpush1.msra.mxu0 0.0
    %366 = vmatprep.subr.mxu0 0.0
    %367 = vmatpush1.msra.mxu0 0.0
    %368 = vmatprep.subr.mxu0 0.0
    %369 = vmatpush1.msra.mxu0 0.0
    %370 = vmatprep.subr.mxu0 0.0
    %371 = vmatpush1.msra.mxu0 0.0
    %372 = vmatprep.subr.mxu0 0.0
    %373 = vmatpush1.msra.mxu0 0.0
    %374 = vmatprep.subr.mxu0 0.0
    %375 = vmatpush1.msra.mxu0 0.0
    %376 = vmatprep.subr.mxu0 0.0
    %377 = vmatpush1.msra.mxu0 0.0
    %378 = vmatprep.subr.mxu0 0.0
    %379 = vmatpush1.msra.mxu0 0.0
    %380 = vmatprep.subr.mxu0 0.0
    %381 = vmatpush1.msra.mxu0 0.0
    %382 = vmatprep.subr.mxu0 0.0
    %383 = vmatpush1.msra.mxu0 0.0
    %384 = vmatprep.subr.mxu0 0.0
    %385 = vmatpush1.msra.mxu0 0.0
    %386 = vmatprep.subr.mxu0 0.0
    %387 = vmatpush1.msra.mxu0 0.0
    %388 = vmatprep.subr.mxu0 0.0
    %389 = vmatpush1.msra.mxu0 0.0
    %390 = vmatprep.subr.mxu0 0.0
    %391 = vmatpush1.msra.mxu0 0.0
    %392 = vmatprep.subr.mxu0 0.0
    %393 = vmatpush1.msra.mxu0 0.0
    %394 = vmatprep.mubr.f32.mxu0 0.0
    %395 = vmatmul.mubr.f32.gmra.mrb[0].mxu0 %v311
    %v396 = vpop.f32.mrb[0].mxu0
    %v397 = vadd.f32 0.0, %v396
    %v398 = vpop.f32.mrb[0].mxu0
    %399 = vmatprep.mubr.f32.mxu0 0.0
    %400 = vmatmul.mubr.f32.gmra.mrb[0].mxu0 %v310
    %v401 = vpop.f32.mrb[0].mxu0
    %v402 = vadd.f32 0.0, %v401
    %v403 = vpop.f32.mrb[0].mxu0
    %404 = vmatprep.mubr.f32.mxu0 0.0
    %405 = vmatmul.mubr.f32.gmra.mrb[0].mxu0 %v309
    %v406 = vpop.f32.mrb[0].mxu0
    %v407 = vadd.f32 0.0, %v406
    %v408 = vpop.f32.mrb[0].mxu0
    %409 = vmatprep.mubr.f32.mxu0 0.0
    %410 = vmatmul.mubr.f32.gmra.mrb[0].mxu0 %v308
    %v411 = vpop.f32.mrb[0].mxu0
    %v412 = vadd.f32 0.0, %v411
    %v413 = vpop.f32.mrb[0].mxu0
    %414 = vmatprep.mubr.f32.mxu0 0.0
    %415 = vmatmul.mubr.f32.gmra.mrb[0].mxu0 %v307
    %v416 = vpop.f32.mrb[0].mxu0
    %v417 = vadd.f32 0.0, %v416
    %v418 = vpop.f32.mrb[0].mxu0
    %419 = vmatprep.mubr.f32.mxu0 0.0
    %420 = vmatmul.mubr.f32.gmra.mrb[0].mxu0 %v312
    %v421 = vpop.f32.mrb[0].mxu0
    %v422 = vadd.f32 0.0, %v421
    %v423 = vpop.f32.mrb[0].mxu0
    %424 = vdwg.mxu0
    %v425 = vadd.f32 %v272, %v397
    %v426 = vadd.f32 %v277, %v402
    %v427 = vadd.f32 %v282, %v407
    %v428 = vadd.f32 %v287, %v412
    %v429 = vadd.f32 %v292, %v417
    %v430 = vadd.f32 %v297, %v422
    %v431 = vld [vmem:[%s3] sm:$0x1]
    %v433 = vlaneseq
    %v434 = vshrl.u32 %v433, 7
    %v435 = vsub.s32 0, %v434
    %v436 = vrot.slane %v431, %v435
    %v438 = vadd.f32 %v425, %v436
    %v439 = vadd.f32 %v426, %v436
    %v440 = vadd.f32 %v427, %v436
    %v441 = vadd.f32 %v428, %v436
    %v442 = vadd.f32 %v429, %v436
    %v443 = vadd.f32 %v430, %v436
    %v444 = vmax.f32 %v438, 0.0
    %v445 = vmax.f32 %v439, 0.0
    %v446 = vmax.f32 %v440, 0.0
    %v447 = vmax.f32 %v441, 0.0
    %v448 = vmax.f32 %v442, 0.0
    %v449 = vmax.f32 %v443, 0.0
    %v450 = vsel %vm55, %v444, 0.0
    %v451 = vsel %vm56, %v445, 0.0
    %v452 = vsel %vm57, %v446, 0.0
    %v453 = vsel %vm55, %v447, 0.0
    %v454 = vsel %vm56, %v448, 0.0
    %v455 = vsel %vm57, %v449, 0.0
    %v456 = vrot.slane %v450, 7
    %v457 = vrot.slane %v451, 7
    %v458 = vrot.slane %v452, 7
    %v459 = vrot.slane %v453, 7
    %v460 = vrot.slane %v454, 7
    %v461 = vrot.slane %v455, 7
    %v462 = vsel %vm70, %v460, %v461
    %v463 = vsel %vm70, %v459, %v460
    %v464 = vsel %vm70, %v458, %v459
    %v465 = vsel %vm70, %v457, %v458
    %v466 = vsel %vm70, %v456, %v457
    %v467 = vsel %vm70, %v461, %v456
    %s468 = scalar_lea.vmem [#allocation7], 384
    %v469 = vld [vmem:[%s468] sm:$0xff]
    %v470 = vld [vmem:[%s468 + $0x8] sm:$0xff]
    %v471 = vld [vmem:[%s468 + $0x10] sm:$0xff]
    %v472 = vld [vmem:[%s468 + $0x18] sm:$0xff]
    %v473 = vld [vmem:[%s468 + $0x20] sm:$0xff]
    %v474 = vld [vmem:[%s468 + $0x28] sm:$0xff]
    %v475 = vld [vmem:[%s468 + $0x30] sm:$0xff]
    %v476 = vld [vmem:[%s468 + $0x38] sm:$0xff]
    %v477 = vld [vmem:[%s468 + $0x40] sm:$0xff]
    %v478 = vld [vmem:[%s468 + $0x48] sm:$0xff]
    %v479 = vld [vmem:[%s468 + $0x50] sm:$0xff]
    %v480 = vld [vmem:[%s468 + $0x58] sm:$0xff]
    %v481 = vld [vmem:[%s468 + $0x60] sm:$0xff]
    %v482 = vld [vmem:[%s468 + $0x68] sm:$0xff]
    %v483 = vld [vmem:[%s468 + $0x70] sm:$0xff]
    %v484 = vld [vmem:[%s468 + $0x78] sm:$0xff]
    %s485 = scalar_lea.vmem [#allocation7], 512
    %v486 = vld [vmem:[%s485] sm:$0xff]
    %v487 = vld [vmem:[%s485 + $0x8] sm:$0xff]
    %v488 = vld [vmem:[%s485 + $0x10] sm:$0xff]
    %v489 = vld [vmem:[%s485 + $0x18] sm:$0xff]
    %v490 = vld [vmem:[%s485 + $0x20] sm:$0xff]
    %v491 = vld [vmem:[%s485 + $0x28] sm:$0xff]
    %v492 = vld [vmem:[%s485 + $0x30] sm:$0xff]
    %v493 = vld [vmem:[%s485 + $0x38] sm:$0xff]
    %v494 = vld [vmem:[%s485 + $0x40] sm:$0xff]
    %v495 = vld [vmem:[%s485 + $0x48] sm:$0xff]
    %v496 = vld [vmem:[%s485 + $0x50] sm:$0xff]
    %v497 = vld [vmem:[%s485 + $0x58] sm:$0xff]
    %v498 = vld [vmem:[%s485 + $0x60] sm:$0xff]
    %v499 = vld [vmem:[%s485 + $0x68] sm:$0xff]
    %v500 = vld [vmem:[%s485 + $0x70] sm:$0xff]
    %v501 = vld [vmem:[%s485 + $0x78] sm:$0xff]
    %502 = vmatprep.subr.mxu0 0.0
    %503 = vmatpush1.msra.mxu0 %v486
    %504 = vmatprep.subr.mxu0 0.0
    %505 = vmatpush1.msra.mxu0 %v487
    %506 = vmatprep.subr.mxu0 0.0
    %507 = vmatpush1.msra.mxu0 %v488
    %508 = vmatprep.subr.mxu0 0.0
    %509 = vmatpush1.msra.mxu0 %v489
    %510 = vmatprep.subr.mxu0 0.0
    %511 = vmatpush1.msra.mxu0 %v490
    %512 = vmatprep.subr.mxu0 0.0
    %513 = vmatpush1.msra.mxu0 %v491
    %514 = vmatprep.subr.mxu0 0.0
    %515 = vmatpush1.msra.mxu0 %v492
    %516 = vmatprep.subr.mxu0 0.0
    %517 = vmatpush1.msra.mxu0 %v493
    %518 = vmatprep.subr.mxu0 0.0
    %519 = vmatpush1.msra.mxu0 %v494
    %520 = vmatprep.subr.mxu0 0.0
    %521 = vmatpush1.msra.mxu0 %v495
    %522 = vmatprep.subr.mxu0 0.0
    %523 = vmatpush1.msra.mxu0 %v496
    %524 = vmatprep.subr.mxu0 0.0
    %525 = vmatpush1.msra.mxu0 %v497
    %526 = vmatprep.subr.mxu0 0.0
    %527 = vmatpush1.msra.mxu0 %v498
    %528 = vmatprep.subr.mxu0 0.0
    %529 = vmatpush1.msra.mxu0 %v499
    %530 = vmatprep.subr.mxu0 0.0
    %531 = vmatpush1.msra.mxu0 %v500
    %532 = vmatprep.subr.mxu0 0.0
    %533 = vmatpush1.msra.mxu0 %v501
    %534 = vmatprep.subr.mxu0 0.0
    %535 = vmatpush1.msra.mxu0 0.0
    %536 = vmatprep.subr.mxu0 0.0
    %537 = vmatpush1.msra.mxu0 0.0
    %538 = vmatprep.subr.mxu0 0.0
    %539 = vmatpush1.msra.mxu0 0.0
    %540 = vmatprep.subr.mxu0 0.0
    %541 = vmatpush1.msra.mxu0 0.0
    %542 = vmatprep.subr.mxu0 0.0
    %543 = vmatpush1.msra.mxu0 0.0
    %544 = vmatprep.subr.mxu0 0.0
    %545 = vmatpush1.msra.mxu0 0.0
    %546 = vmatprep.subr.mxu0 0.0
    %547 = vmatpush1.msra.mxu0 0.0
    %548 = vmatprep.subr.mxu0 0.0
    %549 = vmatpush1.msra.mxu0 0.0
    %550 = vmatprep.subr.mxu0 0.0
    %551 = vmatpush1.msra.mxu0 0.0
    %552 = vmatprep.subr.mxu0 0.0
    %553 = vmatpush1.msra.mxu0 0.0
    %554 = vmatprep.subr.mxu0 0.0
    %555 = vmatpush1.msra.mxu0 0.0
    %556 = vmatprep.subr.mxu0 0.0
    %557 = vmatpush1.msra.mxu0 0.0
    %558 = vmatprep.subr.mxu0 0.0
    %559 = vmatpush1.msra.mxu0 0.0
    %560 = vmatprep.subr.mxu0 0.0
    %561 = vmatpush1.msra.mxu0 0.0
    %562 = vmatprep.subr.mxu0 0.0
    %563 = vmatpush1.msra.mxu0 0.0
    %564 = vmatprep.subr.mxu0 0.0
    %565 = vmatpush1.msra.mxu0 0.0
    %566 = vmatprep.mubr.f32.mxu0 0.0
    %567 = vmatmul.mubr.f32.gmra.mrb[0].mxu0 %v450
    %v568 = vpop.f32.mrb[0].mxu0
    %v569 = vadd.f32 0.0, %v568
    %v570 = vpop.f32.mrb[0].mxu0
    %571 = vmatprep.mubr.f32.mxu0 0.0
    %572 = vmatmul.mubr.f32.gmra.mrb[0].mxu0 %v451
    %v573 = vpop.f32.mrb[0].mxu0
    %v574 = vadd.f32 0.0, %v573
    %v575 = vpop.f32.mrb[0].mxu0
    %576 = vmatprep.mubr.f32.mxu0 0.0
    %577 = vmatmul.mubr.f32.gmra.mrb[0].mxu0 %v452
    %v578 = vpop.f32.mrb[0].mxu0
    %v579 = vadd.f32 0.0, %v578
    %v580 = vpop.f32.mrb[0].mxu0
    %581 = vmatprep.mubr.f32.mxu0 0.0
    %582 = vmatmul.mubr.f32.gmra.mrb[0].mxu0 %v453
    %v583 = vpop.f32.mrb[0].mxu0
    %v584 = vadd.f32 0.0, %v583
    %v585 = vpop.f32.mrb[0].mxu0
    %586 = vmatprep.mubr.f32.mxu0 0.0
    %587 = vmatmul.mubr.f32.gmra.mrb[0].mxu0 %v454
    %v588 = vpop.f32.mrb[0].mxu0
    %v589 = vadd.f32 0.0, %v588
    %v590 = vpop.f32.mrb[0].mxu0
    %591 = vmatprep.mubr.f32.mxu0 0.0
    %592 = vmatmul.mubr.f32.gmra.mrb[0].mxu0 %v455
    %v593 = vpop.f32.mrb[0].mxu0
    %v594 = vadd.f32 0.0, %v593
    %v595 = vpop.f32.mrb[0].mxu0
    %596 = vdwg.mxu0
    %597 = vmatprep.subr.mxu0 0.0
    %598 = vmatpush1.msra.mxu0 %v469
    %599 = vmatprep.subr.mxu0 0.0
    %600 = vmatpush1.msra.mxu0 %v470
    %601 = vmatprep.subr.mxu0 0.0
    %602 = vmatpush1.msra.mxu0 %v471
    %603 = vmatprep.subr.mxu0 0.0
    %604 = vmatpush1.msra.mxu0 %v472
    %605 = vmatprep.subr.mxu0 0.0
    %606 = vmatpush1.msra.mxu0 %v473
    %607 = vmatprep.subr.mxu0 0.0
    %608 = vmatpush1.msra.mxu0 %v474
    %609 = vmatprep.subr.mxu0 0.0
    %610 = vmatpush1.msra.mxu0 %v475
    %611 = vmatprep.subr.mxu0 0.0
    %612 = vmatpush1.msra.mxu0 %v476
    %613 = vmatprep.subr.mxu0 0.0
    %614 = vmatpush1.msra.mxu0 %v477
    %615 = vmatprep.subr.mxu0 0.0
    %616 = vmatpush1.msra.mxu0 %v478
    %617 = vmatprep.subr.mxu0 0.0
    %618 = vmatpush1.msra.mxu0 %v479
    %619 = vmatprep.subr.mxu0 0.0
    %620 = vmatpush1.msra.mxu0 %v480
    %621 = vmatprep.subr.mxu0 0.0
    %622 = vmatpush1.msra.mxu0 %v481
    %623 = vmatprep.subr.mxu0 0.0
    %624 = vmatpush1.msra.mxu0 %v482
    %625 = vmatprep.subr.mxu0 0.0
    %626 = vmatpush1.msra.mxu0 %v483
    %627 = vmatprep.subr.mxu0 0.0
    %628 = vmatpush1.msra.mxu0 %v484
    %629 = vmatprep.subr.mxu0 0.0
    %630 = vmatpush1.msra.mxu0 0.0
    %631 = vmatprep.subr.mxu0 0.0
    %632 = vmatpush1.msra.mxu0 0.0
    %633 = vmatprep.subr.mxu0 0.0
    %634 = vmatpush1.msra.mxu0 0.0
    %635 = vmatprep.subr.mxu0 0.0
    %636 = vmatpush1.msra.mxu0 0.0
    %637 = vmatprep.subr.mxu0 0.0
    %638 = vmatpush1.msra.mxu0 0.0
    %639 = vmatprep.subr.mxu0 0.0
    %640 = vmatpush1.msra.mxu0 0.0
    %641 = vmatprep.subr.mxu0 0.0
    %642 = vmatpush1.msra.mxu0 0.0
    %643 = vmatprep.subr.mxu0 0.0
    %644 = vmatpush1.msra.mxu0 0.0
    %645 = vmatprep.subr.mxu0 0.0
    %646 = vmatpush1.msra.mxu0 0.0
    %647 = vmatprep.subr.mxu0 0.0
    %648 = vmatpush1.msra.mxu0 0.0
    %649 = vmatprep.subr.mxu0 0.0
    %650 = vmatpush1.msra.mxu0 0.0
    %651 = vmatprep.subr.mxu0 0.0
    %652 = vmatpush1.msra.mxu0 0.0
    %653 = vmatprep.subr.mxu0 0.0
    %654 = vmatpush1.msra.mxu0 0.0
    %655 = vmatprep.subr.mxu0 0.0
    %656 = vmatpush1.msra.mxu0 0.0
    %657 = vmatprep.subr.mxu0 0.0
    %658 = vmatpush1.msra.mxu0 0.0
    %659 = vmatprep.subr.mxu0 0.0
    %660 = vmatpush1.msra.mxu0 0.0
    %661 = vmatprep.mubr.f32.mxu0 0.0
    %662 = vmatmul.mubr.f32.gmra.mrb[0].mxu0 %v467
    %v663 = vpop.f32.mrb[0].mxu0
    %v664 = vadd.f32 %v569, %v663
    %v665 = vpop.f32.mrb[0].mxu0
    %666 = vmatprep.mubr.f32.mxu0 0.0
    %667 = vmatmul.mubr.f32.gmra.mrb[0].mxu0 %v466
    %v668 = vpop.f32.mrb[0].mxu0
    %v669 = vadd.f32 %v574, %v668
    %v670 = vpop.f32.mrb[0].mxu0
    %671 = vmatprep.mubr.f32.mxu0 0.0
    %672 = vmatmul.mubr.f32.gmra.mrb[0].mxu0 %v465
    %v673 = vpop.f32.mrb[0].mxu0
    %v674 = vadd.f32 %v579, %v673
    %v675 = vpop.f32.mrb[0].mxu0
    %676 = vmatprep.mubr.f32.mxu0 0.0
    %677 = vmatmul.mubr.f32.gmra.mrb[0].mxu0 %v464
    %v678 = vpop.f32.mrb[0].mxu0
    %v679 = vadd.f32 %v584, %v678
    %v680 = vpop.f32.mrb[0].mxu0
    %681 = vmatprep.mubr.f32.mxu0 0.0
    %682 = vmatmul.mubr.f32.gmra.mrb[0].mxu0 %v463
    %v683 = vpop.f32.mrb[0].mxu0
    %v684 = vadd.f32 %v589, %v683
    %v685 = vpop.f32.mrb[0].mxu0
    %686 = vmatprep.mubr.f32.mxu0 0.0
    %687 = vmatmul.mubr.f32.gmra.mrb[0].mxu0 %v462
    %v688 = vpop.f32.mrb[0].mxu0
    %v689 = vadd.f32 %v594, %v688
    %v690 = vpop.f32.mrb[0].mxu0
    %691 = vdwg.mxu0
    %v692 = vrot.slane %v450, 1
    %v693 = vrot.slane %v451, 1
    %v694 = vrot.slane %v452, 1
    %v695 = vrot.slane %v453, 1
    %v696 = vrot.slane %v454, 1
    %v697 = vrot.slane %v455, 1
    %v698 = vsel %vm306, %v696, %v697
    %v699 = vsel %vm306, %v695, %v696
    %v700 = vsel %vm306, %v694, %v695
    %v701 = vsel %vm306, %v693, %v694
    %v702 = vsel %vm306, %v692, %v693
    %v703 = vsel %vm306, %v697, %v692
    %s704 = scalar_lea.vmem [#allocation7], 640
    %v705 = vld [vmem:[%s704] sm:$0xff]
    %v706 = vld [vmem:[%s704 + $0x8] sm:$0xff]
    %v707 = vld [vmem:[%s704 + $0x10] sm:$0xff]
    %v708 = vld [vmem:[%s704 + $0x18] sm:$0xff]
    %v709 = vld [vmem:[%s704 + $0x20] sm:$0xff]
    %v710 = vld [vmem:[%s704 + $0x28] sm:$0xff]
    %v711 = vld [vmem:[%s704 + $0x30] sm:$0xff]
    %v712 = vld [vmem:[%s704 + $0x38] sm:$0xff]
    %v713 = vld [vmem:[%s704 + $0x40] sm:$0xff]
    %v714 = vld [vmem:[%s704 + $0x48] sm:$0xff]
    %v715 = vld [vmem:[%s704 + $0x50] sm:$0xff]
    %v716 = vld [vmem:[%s704 + $0x58] sm:$0xff]
    %v717 = vld [vmem:[%s704 + $0x60] sm:$0xff]
    %v718 = vld [vmem:[%s704 + $0x68] sm:$0xff]
    %v719 = vld [vmem:[%s704 + $0x70] sm:$0xff]
    %v720 = vld [vmem:[%s704 + $0x78] sm:$0xff]
    %721 = vmatprep.subr.mxu0 0.0
    %722 = vmatpush1.msra.mxu0 %v705
    %723 = vmatprep.subr.mxu0 0.0
    %724 = vmatpush1.msra.mxu0 %v706
    %725 = vmatprep.subr.mxu0 0.0
    %726 = vmatpush1.msra.mxu0 %v707
    %727 = vmatprep.subr.mxu0 0.0
    %728 = vmatpush1.msra.mxu0 %v708
    %729 = vmatprep.subr.mxu0 0.0
    %730 = vmatpush1.msra.mxu0 %v709
    %731 = vmatprep.subr.mxu0 0.0
    %732 = vmatpush1.msra.mxu0 %v710
    %733 = vmatprep.subr.mxu0 0.0
    %734 = vmatpush1.msra.mxu0 %v711
    %735 = vmatprep.subr.mxu0 0.0
    %736 = vmatpush1.msra.mxu0 %v712
    %737 = vmatprep.subr.mxu0 0.0
    %738 = vmatpush1.msra.mxu0 %v713
    %739 = vmatprep.subr.mxu0 0.0
    %740 = vmatpush1.msra.mxu0 %v714
    %741 = vmatprep.subr.mxu0 0.0
    %742 = vmatpush1.msra.mxu0 %v715
    %743 = vmatprep.subr.mxu0 0.0
    %744 = vmatpush1.msra.mxu0 %v716
    %745 = vmatprep.subr.mxu0 0.0
    %746 = vmatpush1.msra.mxu0 %v717
    %747 = vmatprep.subr.mxu0 0.0
    %748 = vmatpush1.msra.mxu0 %v718
    %749 = vmatprep.subr.mxu0 0.0
    %750 = vmatpush1.msra.mxu0 %v719
    %751 = vmatprep.subr.mxu0 0.0
    %752 = vmatpush1.msra.mxu0 %v720
    %753 = vmatprep.subr.mxu0 0.0
    %754 = vmatpush1.msra.mxu0 0.0
    %755 = vmatprep.subr.mxu0 0.0
    %756 = vmatpush1.msra.mxu0 0.0
    %757 = vmatprep.subr.mxu0 0.0
    %758 = vmatpush1.msra.mxu0 0.0
    %759 = vmatprep.subr.mxu0 0.0
    %760 = vmatpush1.msra.mxu0 0.0
    %761 = vmatprep.subr.mxu0 0.0
    %762 = vmatpush1.msra.mxu0 0.0
    %763 = vmatprep.subr.mxu0 0.0
    %764 = vmatpush1.msra.mxu0 0.0
    %765 = vmatprep.subr.mxu0 0.0
    %766 = vmatpush1.msra.mxu0 0.0
    %767 = vmatprep.subr.mxu0 0.0
    %768 = vmatpush1.msra.mxu0 0.0
    %769 = vmatprep.subr.mxu0 0.0
    %770 = vmatpush1.msra.mxu0 0.0
    %771 = vmatprep.subr.mxu0 0.0
    %772 = vmatpush1.msra.mxu0 0.0
    %773 = vmatprep.subr.mxu0 0.0
    %774 = vmatpush1.msra.mxu0 0.0
    %775 = vmatprep.subr.mxu0 0.0
    %776 = vmatpush1.msra.mxu0 0.0
    %777 = vmatprep.subr.mxu0 0.0
    %778 = vmatpush1.msra.mxu0 0.0
    %779 = vmatprep.subr.mxu0 0.0
    %780 = vmatpush1.msra.mxu0 0.0
    %781 = vmatprep.subr.mxu0 0.0
    %782 = vmatpush1.msra.mxu0 0.0
    %783 = vmatprep.subr.mxu0 0.0
    %784 = vmatpush1.msra.mxu0 0.0
    %785 = vmatprep.mubr.f32.mxu0 0.0
    %786 = vmatmul.mubr.f32.gmra.mrb[0].mxu0 %v702
    %v787 = vpop.f32.mrb[0].mxu0
    %v788 = vadd.f32 0.0, %v787
    %v789 = vpop.f32.mrb[0].mxu0
    %790 = vmatprep.mubr.f32.mxu0 0.0
    %791 = vmatmul.mubr.f32.gmra.mrb[0].mxu0 %v701
    %v792 = vpop.f32.mrb[0].mxu0
    %v793 = vadd.f32 0.0, %v792
    %v794 = vpop.f32.mrb[0].mxu0
    %795 = vmatprep.mubr.f32.mxu0 0.0
    %796 = vmatmul.mubr.f32.gmra.mrb[0].mxu0 %v700
    %v797 = vpop.f32.mrb[0].mxu0
    %v798 = vadd.f32 0.0, %v797
    %v799 = vpop.f32.mrb[0].mxu0
    %800 = vmatprep.mubr.f32.mxu0 0.0
    %801 = vmatmul.mubr.f32.gmra.mrb[0].mxu0 %v699
    %v802 = vpop.f32.mrb[0].mxu0
    %v803 = vadd.f32 0.0, %v802
    %v804 = vpop.f32.mrb[0].mxu0
    %805 = vmatprep.mubr.f32.mxu0 0.0
    %806 = vmatmul.mubr.f32.gmra.mrb[0].mxu0 %v698
    %v807 = vpop.f32.mrb[0].mxu0
    %v808 = vadd.f32 0.0, %v807
    %v809 = vpop.f32.mrb[0].mxu0
    %810 = vmatprep.mubr.f32.mxu0 0.0
    %811 = vmatmul.mubr.f32.gmra.mrb[0].mxu0 %v703
    %v812 = vpop.f32.mrb[0].mxu0
    %v813 = vadd.f32 0.0, %v812
    %v814 = vpop.f32.mrb[0].mxu0
    %815 = vdwg.mxu0
    %v816 = vadd.f32 %v664, %v788
    %v817 = vadd.f32 %v669, %v793
    %v818 = vadd.f32 %v674, %v798
    %v819 = vadd.f32 %v679, %v803
    %v820 = vadd.f32 %v684, %v808
    %v821 = vadd.f32 %v689, %v813
    %s822 = scalar_lea.vmem %s3, 1
    %v823 = vld [vmem:[%s822] sm:$0x1]
    %v825 = vlaneseq
    %v826 = vshrl.u32 %v825, 7
    %v827 = vsub.s32 0, %v826
    %v828 = vrot.slane %v823, %v827
    %v830 = vadd.f32 %v816, %v828
    %v831 = vadd.f32 %v817, %v828
    %v832 = vadd.f32 %v818, %v828
    %v833 = vadd.f32 %v819, %v828
    %v834 = vadd.f32 %v820, %v828
    %v835 = vadd.f32 %v821, %v828
    %v836 = vmax.f32 %v830, 0.0
    %v837 = vmax.f32 %v831, 0.0
    %v838 = vmax.f32 %v832, 0.0
    %v839 = vmax.f32 %v833, 0.0
    %v840 = vmax.f32 %v834, 0.0
    %v841 = vmax.f32 %v835, 0.0
    %v842 = vsel %vm55, %v836, 0.0
    %v843 = vsel %vm56, %v837, 0.0
    %v844 = vsel %vm57, %v838, 0.0
    %v845 = vsel %vm55, %v839, 0.0
    %v846 = vsel %vm56, %v840, 0.0
    %v847 = vsel %vm57, %v841, 0.0
    %848 = vst [vmem:[#allocation9] sm:$0xff] %v842
    %849 = vst [vmem:[#allocation9 + $0x8] sm:$0xff] %v843
    %850 = vst [vmem:[#allocation9 + $0x10] sm:$0xff] %v844
    %851 = vst [vmem:[#allocation9 + $0x18] sm:$0xff] %v845
    %852 = vst [vmem:[#allocation9 + $0x20] sm:$0xff] %v846
    %853 = vst [vmem:[#allocation9 + $0x28] sm:$0xff] %v847
    %s854 = smul.u32 0, 2
    %s855 = sld [smem:[#allocation3 + %s854]]
    %v856 = vstv %s855
    %vm857 = vcmp.lt.s32.totalorder %v52, %v856
    %vm858 = vcmp.lt.s32.totalorder %v53, %v856
    %vm859 = vcmp.lt.s32.totalorder %v54, %v856
    %v860 = vsel %vm857, %v842, -inf
    %v861 = vsel %vm858, %v843, -inf
    %v862 = vsel %vm859, %v844, -inf
    %v863 = vmax.f32 %v860, %v861
    %v864 = vmax.f32 %v863, %v862
    %v865 = vrot.slane %v864, 4
    %v866 = vmax.f32 %v864, %v865
    %v867 = vrot.slane %v866, 2
    %v868 = vmax.f32 %v866, %v867
    %v869 = vrot.slane %v868, 1
    %v870 = vmax.f32 %v868, %v869
    %p871 = scmp.gt.s32.totalorder %s855, 0
    %s872 = scalar_select %p871, 1, 0
    %v873 = vstv %s872
    %vm874 = vcmp.eq.s32.totalorder %v873, 1
    %v875 = vsel %vm874, %v870, 0.0
    %876 = vst [vmem:[#allocation10] sm:$0x1] %v875
    %s877 = sadd.s32 %s854, 1
    %s878 = sld [smem:[#allocation3 + %s877]]
    %v879 = vstv %s878
    %vm880 = vcmp.lt.s32.totalorder %v52, %v879
    %vm881 = vcmp.lt.s32.totalorder %v53, %v879
    %vm882 = vcmp.lt.s32.totalorder %v54, %v879
    %v883 = vsel %vm880, %v845, -inf
    %v884 = vsel %vm881, %v846, -inf
    %v885 = vsel %vm882, %v847, -inf
    %v886 = vmax.f32 %v883, %v884
    %v887 = vmax.f32 %v886, %v885
    %v888 = vrot.slane %v887, 4
    %v889 = vmax.f32 %v887, %v888
    %v890 = vrot.slane %v889, 2
    %v891 = vmax.f32 %v889, %v890
    %v892 = vrot.slane %v891, 1
    %v893 = vmax.f32 %v891, %v892
    %p894 = scmp.gt.s32.totalorder %s878, 0
    %s895 = scalar_select %p894, 1, 0
    %v896 = vstv %s895
    %vm897 = vcmp.eq.s32.totalorder %v896, 1
    %v898 = vsel %vm897, %v893, 0.0
    %899 = vst [vmem:[#allocation10 + $0x1] sm:$0x1] %v898
    // Predicated region
    $region22: #{tpu_custom_call.1} parent=1 // pred_check
      _
    $region23: #{tpu_custom_call.1} parent=1 // pred_check_branch
      %901 = sbr.rel (0) target = $region25
    $region24: #{tpu_custom_call.1} parent=1 // pred_region
      %s903 = ssub.s32 768, 768
      %904 = vsyncadd [#allocation6], %s903
      %s905 = sshll.u32 [#allocation9], 4
      %s906 = int_to_ptr.vmem [resolvable:$true] %s905
      %911 = dma.vmem_to_hbm [thread:$0]  %s906, 768, %s4, [#allocation6], 128, 128, 8
    $region25: #{tpu_custom_call.1} parent=1 // pred_fallthru
      _
    // Predicated region
    $region26: #{tpu_custom_call.1} parent=1 // pred_check
      _
    $region27: #{tpu_custom_call.1} parent=1 // pred_check_branch
      %913 = sbr.rel (0) target = $region29
    $region28: #{tpu_custom_call.1} parent=1 // pred_region
      %s915 = ssub.s32 32, 32
      %916 = vsyncadd [#allocation11], %s915
      %s918 = sshll.u32 [#allocation10], 4
      %s919 = int_to_ptr.vmem [resolvable:$true] %s918
      %921 = dma.vmem_to_hbm [thread:$0]  %s919, 32, %s5, [#allocation11]
    $region29: #{tpu_custom_call.1} parent=1 // pred_fallthru
      _
    // Predicated region
    $region30: #{tpu_custom_call.1} parent=1 // pred_check
      _
    $region31: #{tpu_custom_call.1} parent=1 // pred_check_branch
      %923 = sbr.rel (0) target = $region33
    $region32: #{tpu_custom_call.1} parent=1 // pred_region
      %924 = dma.done [#allocation6], 768
    $region33: #{tpu_custom_call.1} parent=1 // pred_fallthru
      _
    // Predicated region
    $region34: #{tpu_custom_call.1} parent=1 // pred_check
      _
    $region35: #{tpu_custom_call.1} parent=1 // pred_check_branch
      %926 = sbr.rel (0) target = $region37
    $region36: #{tpu_custom_call.1} parent=1 // pred_region
      %927 = dma.done [#allocation11], 32
    $region37: #{tpu_custom_call.1} parent=1 // pred_fallthru
      _
    %928 = vsyncpa [#allocation5], 1
    %929 = vsyncpa [#allocation8], 1
    %930 = vsyncpa [#allocation6], 1
    %931 = vsyncpa [#allocation11], 1

</llo_original>
